<compile_context>
chip_gen: v5e
topology: v5e:2x2
jax: 0.10.0
libtpu: 0.0.40
codegen_flags: <defaults>
</compile_context>

<pallas_src>
import jax
import jax.numpy as jnp
from jax.experimental import pallas as pl
from jax.experimental.pallas import tpu as pltpu


def _local_disc_kernel(x_ref, w0_ref, b0_ref, w1_ref, b1_ref, w2_ref, b2_ref,
                       o_ref):
    # x tile: (1, C_in, tp) f32, channels-major, pixels along lanes.
    # Cast to the matmul dtype in-kernel (VPU work, hidden under the MXU).
    x = x_ref[0].astype(w0_ref.dtype)

    # layer 0: (inter, C_in) @ (C_in, tp) -> (inter, tp), f32 accumulation.
    # K = C_in is tiny (MXU contraction padded); accepted, do NOT move to VPU.
    h = jnp.dot(w0_ref[...], x, preferred_element_type=jnp.float32)
    h = jnp.maximum(h + b0_ref[...], 0.0)

    # layer 1 (dominant): (inter, inter) @ (inter, tp) -> (inter, tp).
    h = jnp.dot(w1_ref[...], h.astype(w1_ref.dtype),
                preferred_element_type=jnp.float32)
    h = jnp.maximum(h + b1_ref[...], 0.0)

    # layer 2: (1, inter) @ (inter, tp) -> (1, tp); b2 is an SMEM scalar.
    out = jnp.dot(w2_ref[...], h.astype(w2_ref.dtype),
                  preferred_element_type=jnp.float32)
    o_ref[0] = (out + b2_ref[0, 0]).astype(o_ref.dtype)


def _const_spec(shape):
    """BlockSpec for a grid-invariant operand; single-buffered if supported."""
    idx_map = lambda n, j: (0,) * len(shape)
    try:
        return pl.BlockSpec(shape, idx_map, pipeline_mode=pl.Buffered(buffer_count=1))
    except TypeError:  # older jax without pipeline_mode -- fall back to default.
        return pl.BlockSpec(shape, idx_map)


def local_discriminator(x_nchw, params, *, tp=4096, use_bf16=True,
                        vmem_limit_bytes=None):
    """Fused 3x (1x1 conv) forward.

    x_nchw: (N, C_in, H, W) float32.
    params: PyTorch-oriented weights:
        w0 (inter, C_in), b0 (inter, 1), w1 (inter, inter), b1 (inter, 1),
        w2 (1, inter),    b2 (1, 1).
    tp: pixel tile (lane dimension), rounded to a multiple of 256.
        Per-generation guidance: v5e 2048-4096, v6e 4096-8192, v7x <=4096
        (budget ~2*inter*tp*4 B of f32 intermediates against 64 MiB/TC).
    use_bf16: run the MXU matmuls in bf16 (f32 accumulation). Default True.
    """
    w0, b0, w1, b1, w2, b2 = (params["w0"], params["b0"], params["w1"],
                              params["b1"], params["w2"], params["b2"])
    N, C_in, H, W = x_nchw.shape
    inter = w0.shape[0]
    HW = H * W

    # NCHW is already channels-major: free reshape, no transpose, no padding.
    x3 = x_nchw.reshape(N, C_in, HW)

    # Pixel tile: multiple of 256 (2x256^2 MXU on v6e/v7x; also fine on v5e),
    # clamped to the lane-rounded row length.  Ragged tail handled by a
    # pl.cdiv grid with a masked overhanging last tile (no jnp.pad copy).
    tp = int(tp)
    tp = max(256, min(tp, pl.cdiv(HW, 256) * 256))
    tp = pl.cdiv(tp, 256) * 256
    num_px_blocks = pl.cdiv(HW, tp)

    # v7x megacore: make sure there are >=2 grid steps so both TCs get work.
    if N * num_px_blocks < 2 and HW > 256:
        tp = max(256, pl.cdiv(pl.cdiv(HW, 2), 256) * 256)
        num_px_blocks = pl.cdiv(HW, tp)

    # Weights cast once in the wrapper (tiny, reused); x stays f32 and is cast
    # in-kernel.  Biases stay f32.
    mm_dtype = jnp.bfloat16 if use_bf16 else x3.dtype
    mm_bytes = 2 if use_bf16 else 4
    w0c = w0.astype(mm_dtype)
    w1c = w1.astype(mm_dtype)
    w2c = w2.astype(mm_dtype)

    # Explicit VMEM limit (v5e defaults to 16 MiB scoped VMEM).  Dominated by
    # the (inter, tp) f32 intermediates; weights are single-buffered.
    if vmem_limit_bytes is None:
        est = (2 * C_in * tp * 4            # double-buffered f32 x blocks
               + 2 * tp * 4                 # double-buffered f32 out blocks
               + (inter * C_in + inter * inter + inter) * mm_bytes  # weights
               + 2 * inter * 4              # biases
               + 3 * inter * tp * 4)        # f32 + bf16 intermediates (conservative)
        vmem_limit_bytes = min(128 * 1024 * 1024,
                               max(32 * 1024 * 1024, int(est * 1.5) + (8 << 20)))

    flops = 2 * N * HW * (inter * C_in + inter * inter + inter)
    bytes_accessed = (N * C_in * HW * 4 + N * HW * 4
                      + (inter * C_in + inter * inter + inter) * mm_bytes
                      + (2 * inter + 1) * 4)

    grid = (N, num_px_blocks)

    out3 = pl.pallas_call(
        _local_disc_kernel,
        out_shape=jax.ShapeDtypeStruct((N, 1, HW), jnp.float32),
        grid_spec=pltpu.PrefetchScalarGridSpec(
            num_scalar_prefetch=0,
            grid=grid,
            in_specs=[
                pl.BlockSpec((1, C_in, tp), lambda n, j: (n, 0, j)),   # x tile
                _const_spec((inter, C_in)),                            # W0
                _const_spec((inter, 1)),                               # b0
                _const_spec((inter, inter)),                           # W1
                _const_spec((inter, 1)),                               # b1
                _const_spec((1, inter)),                               # W2
                pl.BlockSpec(memory_space=pltpu.MemorySpace.SMEM),     # b2 scalar
            ],
            out_specs=pl.BlockSpec((1, 1, tp), lambda n, j: (n, 0, j)),
        ),
        compiler_params=pltpu.CompilerParams(
            dimension_semantics=("parallel", "parallel"),
            vmem_limit_bytes=vmem_limit_bytes,
        ),
        cost_estimate=pl.CostEstimate(flops=flops,
                                      bytes_accessed=bytes_accessed,
                                      transcendentals=0),
    )(x3, w0c, b0, w1c, b1, w2c, b2)

    # Restore (N, 1, H, W) to match the PyTorch Conv2d output layout.
    return out3.reshape(N, 1, H, W)


def init_params(key, in_channels, inter_ch):
    """Deterministic synthetic init; shapes mirror Conv2d(kernel_size=1) weights."""
    k = jax.random.split(key, 6)
    s0 = 1.0 / jnp.sqrt(in_channels)
    s1 = 1.0 / jnp.sqrt(inter_ch)
    return {
        # PyTorch (C_out, C_in) orientation; kernel computes W @ x.
        "w0": jax.random.uniform(k[0], (inter_ch, in_channels), jnp.float32, -s0, s0),
        "b0": jax.random.uniform(k[1], (inter_ch, 1), jnp.float32, -s0, s0),
        "w1": jax.random.uniform(k[2], (inter_ch, inter_ch), jnp.float32, -s1, s1),
        "b1": jax.random.uniform(k[3], (inter_ch, 1), jnp.float32, -s1, s1),
        "w2": jax.random.uniform(k[4], (1, inter_ch), jnp.float32, -s1, s1),
        "b2": jax.random.uniform(k[5], (1, 1), jnp.float32, -s1, s1),
    }


def _reference(x_nchw, p):
    """Pure-JAX reference of the PyTorch forward (1x1 convs == channel matmuls)."""
    N, C, H, W = x_nchw.shape
    hp = jax.lax.Precision.HIGHEST
    x = x_nchw.reshape(N, C, H * W)
    h = jnp.maximum(jnp.einsum("oc,ncp->nop", p["w0"], x, precision=hp)
                    + p["b0"][None], 0.0)
    h = jnp.maximum(jnp.einsum("oc,ncp->nop", p["w1"], h, precision=hp)
                    + p["b1"][None], 0.0)
    o = jnp.einsum("oc,ncp->nop", p["w2"], h, precision=hp) + p["b2"][None]
    return o.reshape(N, 1, H, W)


if __name__ == "__main__":
    key = jax.random.PRNGKey(0)
    kx1, kx2, kp = jax.random.split(key, 3)

    # Small shapes consistent with the module: M_ch_num=4, E_sz=4 -> in_ch=8,
    # inter_ch=32 (scaled-down stand-in for 512).
    M_ch_num, E_sz, inter_ch = 4, 4, 32
    in_channels = M_ch_num + E_sz
    params = init_params(kp, in_channels, inter_ch)

    # --- test 1: default bf16 MXU path (loose tolerance) -------------------
    N, H, W = 2, 16, 16
    x = jax.random.normal(kx1, (N, in_channels, H, W), jnp.float32)
    ref = _reference(x, params)

    out_bf16 = jax.block_until_ready(local_discriminator(x, params))
    assert out_bf16.shape == (N, 1, H, W)
    assert jnp.allclose(out_bf16, ref, atol=3e-2, rtol=3e-2), \
        float(jnp.max(jnp.abs(out_bf16 - ref)))

    # --- test 2: f32 matmul path (tight tolerance) --------------------------
    out_f32 = jax.block_until_ready(local_discriminator(x, params, use_bf16=False))
    assert jnp.allclose(out_f32, ref, atol=2e-4, rtol=2e-4), \
        float(jnp.max(jnp.abs(out_f32 - ref)))

    # --- test 3: ragged multi-step pixel grid (HW > tp, HW % tp != 0) ------
    N2, H2, W2 = 1, 20, 24          # HW = 480 -> two 256-wide tiles, 2nd overhangs
    x2 = jax.random.normal(kx2, (N2, in_channels, H2, W2), jnp.float32)
    out2 = jax.block_until_ready(local_discriminator(x2, params, tp=256))
    ref2 = _reference(x2, params)
    assert out2.shape == (N2, 1, H2, W2)
    assert jnp.allclose(out2, ref2, atol=3e-2, rtol=3e-2), \
        float(jnp.max(jnp.abs(out2 - ref2)))

    print("KERNEL_OK")
</pallas_src>

<mosaic_0001>
module attributes {stable_mosaic.version = 11 : i64} {
  func.func @_local_disc_kernel(%arg0: i32, %arg1: i32, %arg2: memref<1x8x256xf32, #tpu.memory_space<vmem>>, %arg3: memref<32x8xbf16, #tpu.memory_space<vmem>>, %arg4: memref<32x1xf32, #tpu.memory_space<vmem>>, %arg5: memref<32x32xbf16, #tpu.memory_space<vmem>>, %arg6: memref<32x1xf32, #tpu.memory_space<vmem>>, %arg7: memref<1x32xbf16, #tpu.memory_space<vmem>>, %arg8: memref<1x1xf32, #tpu.memory_space<smem>>, %arg9: memref<1x1x256xf32, #tpu.memory_space<vmem>>) attributes {dimension_semantics = [#tpu.dimension_semantics<parallel>, #tpu.dimension_semantics<parallel>], iteration_bounds = array<i64: 2, 1>, scalar_prefetch = 0 : i64, scratch_operands = 0 : i64, tpu.core_type = #tpu.core_type<tc>, window_params = [{transform_indices = @transform_0, window_bounds = array<i64: 1, 8, 256>}, {pipeline_mode = #tpu.pipeline_mode<synchronous>, transform_indices = @transform_1, window_bounds = array<i64: 32, 8>}, {pipeline_mode = #tpu.pipeline_mode<synchronous>, transform_indices = @transform_2, window_bounds = array<i64: 32, 1>}, {pipeline_mode = #tpu.pipeline_mode<synchronous>, transform_indices = @transform_3, window_bounds = array<i64: 32, 32>}, {pipeline_mode = #tpu.pipeline_mode<synchronous>, transform_indices = @transform_4, window_bounds = array<i64: 32, 1>}, {pipeline_mode = #tpu.pipeline_mode<synchronous>, transform_indices = @transform_5, window_bounds = array<i64: 1, 32>}, {transform_indices = @transform_6, window_bounds = array<i64: 1, 1>}, {transform_indices = @transform_7, window_bounds = array<i64: 1, 1, 256>}]} {
    %c0 = arith.constant 0 : index
    %c0_0 = arith.constant 0 : index
    %c0_1 = arith.constant 0 : index
    %0 = vector.load %arg2[%c0, %c0_0, %c0_1] : memref<1x8x256xf32, #tpu.memory_space<vmem>>, vector<1x8x256xf32>
    %1 = vector.shape_cast %0 : vector<1x8x256xf32> to vector<8x256xf32>
    %2 = arith.truncf %1 : vector<8x256xf32> to vector<8x256xbf16>
    %c0_2 = arith.constant 0 : index
    %c0_3 = arith.constant 0 : index
    %3 = vector.load %arg3[%c0_2, %c0_3] : memref<32x8xbf16, #tpu.memory_space<vmem>>, vector<32x8xbf16>
    %cst = arith.constant dense<0.000000e+00> : vector<32x256xf32>
    %4 = tpu.matmul %3, %2, %cst {dimension_numbers = #tpu.dot_dimension_numbers<[1], [0], [0], [1], [0, 0, 1, 1], [], []>} : vector<32x8xbf16>, vector<8x256xbf16>, vector<32x256xf32> -> vector<32x256xf32>
    %c0_4 = arith.constant 0 : index
    %c0_5 = arith.constant 0 : index
    %5 = vector.load %arg4[%c0_4, %c0_5] : memref<32x1xf32, #tpu.memory_space<vmem>>, vector<32x1xf32>
    %6 = vector.broadcast %5 : vector<32x1xf32> to vector<32x256xf32>
    %7 = arith.addf %4, %6 : vector<32x256xf32>
    %cst_6 = arith.constant 0.000000e+00 : f32
    %8 = vector.broadcast %cst_6 : f32 to vector<32x256xf32>
    %9 = arith.maximumf %7, %8 : vector<32x256xf32>
    %c0_7 = arith.constant 0 : index
    %c0_8 = arith.constant 0 : index
    %10 = vector.load %arg5[%c0_7, %c0_8] : memref<32x32xbf16, #tpu.memory_space<vmem>>, vector<32x32xbf16>
    %11 = arith.truncf %9 : vector<32x256xf32> to vector<32x256xbf16>
    %cst_9 = arith.constant dense<0.000000e+00> : vector<32x256xf32>
    %12 = tpu.matmul %10, %11, %cst_9 {dimension_numbers = #tpu.dot_dimension_numbers<[1], [0], [0], [1], [0, 0, 1, 1], [], []>} : vector<32x32xbf16>, vector<32x256xbf16>, vector<32x256xf32> -> vector<32x256xf32>
    %c0_10 = arith.constant 0 : index
    %c0_11 = arith.constant 0 : index
    %13 = vector.load %arg6[%c0_10, %c0_11] : memref<32x1xf32, #tpu.memory_space<vmem>>, vector<32x1xf32>
    %14 = vector.broadcast %13 : vector<32x1xf32> to vector<32x256xf32>
    %15 = arith.addf %12, %14 : vector<32x256xf32>
    %cst_12 = arith.constant 0.000000e+00 : f32
    %16 = vector.broadcast %cst_12 : f32 to vector<32x256xf32>
    %17 = arith.maximumf %15, %16 : vector<32x256xf32>
    %c0_13 = arith.constant 0 : index
    %c0_14 = arith.constant 0 : index
    %18 = vector.load %arg7[%c0_13, %c0_14] : memref<1x32xbf16, #tpu.memory_space<vmem>>, vector<1x32xbf16>
    %19 = arith.truncf %17 : vector<32x256xf32> to vector<32x256xbf16>
    %cst_15 = arith.constant dense<0.000000e+00> : vector<1x256xf32>
    %20 = tpu.matmul %18, %19, %cst_15 {dimension_numbers = #tpu.dot_dimension_numbers<[1], [0], [0], [1], [0, 0, 1, 1], [], []>} : vector<1x32xbf16>, vector<32x256xbf16>, vector<1x256xf32> -> vector<1x256xf32>
    %c0_16 = arith.constant 0 : index
    %c0_17 = arith.constant 0 : index
    %21 = memref.load %arg8[%c0_16, %c0_17] : memref<1x1xf32, #tpu.memory_space<smem>>
    %22 = vector.broadcast %21 : f32 to vector<1x256xf32>
    %23 = arith.addf %20, %22 : vector<1x256xf32>
    %c0_18 = arith.constant 0 : index
    %c0_19 = arith.constant 0 : index
    %c0_20 = arith.constant 0 : index
    %24 = vector.load %arg9[%c0_18, %c0_19, %c0_20] : memref<1x1x256xf32, #tpu.memory_space<vmem>>, vector<1x1x256xf32>
    %25 = vector.shape_cast %24 : vector<1x1x256xf32> to vector<1x256xf32>
    %26 = vector.shape_cast %23 : vector<1x256xf32> to vector<1x1x256xf32>
    tpu.vector_store %arg9[%c0_18, %c0_19, %c0_20], %26 {strides = array<i32>} : memref<1x1x256xf32, #tpu.memory_space<vmem>>, vector<1x1x256xf32>,
    return
  }
  func.func @transform_0(%arg0: i32, %arg1: i32) -> (i32, i32, i32) {
    %c0_i32 = arith.constant 0 : i32
    %c0_i32_0 = arith.constant 0 : i32
    return %arg0, %c0_i32, %arg1 : i32, i32, i32
  }
  func.func @transform_1(%arg0: i32, %arg1: i32) -> (i32, i32) {
    %c0_i32 = arith.constant 0 : i32
    %c0_i32_0 = arith.constant 0 : i32
    %c0_i32_1 = arith.constant 0 : i32
    return %c0_i32, %c0_i32_0 : i32, i32
  }
  func.func @transform_2(%arg0: i32, %arg1: i32) -> (i32, i32) {
    %c0_i32 = arith.constant 0 : i32
    %c0_i32_0 = arith.constant 0 : i32
    %c0_i32_1 = arith.constant 0 : i32
    return %c0_i32, %c0_i32_0 : i32, i32
  }
  func.func @transform_3(%arg0: i32, %arg1: i32) -> (i32, i32) {
    %c0_i32 = arith.constant 0 : i32
    %c0_i32_0 = arith.constant 0 : i32
    %c0_i32_1 = arith.constant 0 : i32
    return %c0_i32, %c0_i32_0 : i32, i32
  }
  func.func @transform_4(%arg0: i32, %arg1: i32) -> (i32, i32) {
    %c0_i32 = arith.constant 0 : i32
    %c0_i32_0 = arith.constant 0 : i32
    %c0_i32_1 = arith.constant 0 : i32
    return %c0_i32, %c0_i32_0 : i32, i32
  }
  func.func @transform_5(%arg0: i32, %arg1: i32) -> (i32, i32) {
    %c0_i32 = arith.constant 0 : i32
    %c0_i32_0 = arith.constant 0 : i32
    %c0_i32_1 = arith.constant 0 : i32
    return %c0_i32, %c0_i32_0 : i32, i32
  }
  func.func @transform_6(%arg0: i32, %arg1: i32) -> (i32, i32) {
    %c0_i32 = arith.constant 0 : i32
    %c0_i32_0 = arith.constant 0 : i32
    %c0_i32_1 = arith.constant 0 : i32
    return %c0_i32, %c0_i32_0 : i32, i32
  }
  func.func @transform_7(%arg0: i32, %arg1: i32) -> (i32, i32, i32) {
    %c0_i32 = arith.constant 0 : i32
    %c0_i32_0 = arith.constant 0 : i32
    return %arg0, %c0_i32, %arg1 : i32, i32, i32
  }
}

</mosaic_0001>

<llo_original>
// kernel: tpu_custom_call.1
$region0: #{tpu_custom_call.1}
  #allocation0 [shape = 'u32[]', space=smem, size = 0x4, offset = 0x4, fixed_abs, tag = 'smem constant byte address 0x4 - core index']
  #allocation1 [shape = 'u32[72,128]{1,0:T(1,128)}', space=vmem, size = 0x9000, scoped, tag = 'internal scratch']
  #allocation2 [shape = 'f32[1,1]{1,0:T(1,128)S(6)}', space=smem, size = 0x200, scoped, tag = 'scoped memory for tpu_custom_call.1']
  %s0 = inlined_call_operand.vmem [shape: f32[2,8,256], index: 0, kind: input, shape index: {}]
  %s1 = inlined_call_operand.vmem [shape: bf16[32,8], index: 1, kind: input, shape index: {}]
  %s2 = inlined_call_operand.vmem [shape: f32[32,1], index: 2, kind: input, shape index: {}]
  %s3 = inlined_call_operand.vmem [shape: bf16[32,32], index: 3, kind: input, shape index: {}]
  %s4 = inlined_call_operand.vmem [shape: f32[32,1], index: 4, kind: input, shape index: {}]
  %s5 = inlined_call_operand.vmem [shape: bf16[1,32], index: 5, kind: input, shape index: {}]
  %s6 = inlined_call_operand.<no memory space> [shape: f32[1,1], index: 6, kind: input, shape index: {}]
  %s7 = inlined_call_operand.hbm [shape: f32[2,1,256], index: 7, kind: output, shape index: {}]
  %s8 = sld [smem:[#allocation0]]
  $region61: #{tpu_custom_call.1} parent=0
    _
  %s10 = ssub.s32 1, %s8
  %s11 = scalar_select 0, %s10, %s8
  %12 = sst [smem:[#allocation2]] %s6
  $region1: #{tpu_custom_call.1} parent=0
    #allocation3 [shape = 'u8[2048]{0}', space=vmem, size = 0x800, scoped, tag = 'output window, operand 0']
    #allocation4 [shape = 's32[2]{0}', space=sflag, size = 0x8, scoped, tag = 'scoped memory for tpu_custom_call.1']
    %13 = vsyncpa [#allocation4], 0
    %s14 = scalar_lea.sflag [#allocation4], 1
    %15 = vsyncpa %s14, 0
    loop: start=0, step=1, limit=4
    $region2: #{tpu_custom_call.1} parent=1 // loop_pre_header
      _
    $region3: #{tpu_custom_call.1} parent=1 // loop_header
      %s17 = sphi 0, %s21
      %p18 = scmp.ge.s32.totalorder %s17, 4
      %s24 = sphi 0, %s36
      %s25 = sphi 0, %s32
      %s26 = sphi 0, %s24
      %s27 = sphi 0, %s25
      %s28 = sphi 0, %s26
      %s29 = sphi 0, %s27
      %s41 = sphi 0, %s43
      %s44 = sphi 0, %s41
      %s45 = sphi 0, %s44
      %s61 = sphi 0, %s45
      %s65 = sphi 0, %s65
      %s67 = sphi 0, %s65
      %s68 = sphi 0, %s67
      %s82 = sphi 0, %s68
      %s86 = sphi 0, %s86
      %s88 = sphi 0, %s86
      %s89 = sphi 0, %s88
      %s103 = sphi 0, %s89
      %s107 = sphi 0, %s107
      %s109 = sphi 0, %s107
      %s110 = sphi 0, %s109
      %s124 = sphi 0, %s110
      %s128 = sphi 0, %s128
      %s130 = sphi 0, %s128
      %s131 = sphi 0, %s130
      %s145 = sphi 0, %s131
      %s149 = sphi 0, %s149
      %s151 = sphi 0, %s149
      %s152 = sphi 0, %s151
      %s166 = sphi 0, %s152
      %s170 = sphi 0, %s170
      %s172 = sphi 0, %s170
      %s173 = sphi 0, %s172
      %s187 = sphi 0, %s173
      %s195 = sphi 0, %s197
      %s198 = sphi 0, %s195
      %s199 = sphi 0, %s198
      %s215 = sphi 0, %s199
    $region4: #{tpu_custom_call.1} parent=1 // loop_header_branch
      %20 = sbr.rel (%p18) target = $region8
    $region5: #{tpu_custom_call.1} parent=1 // loop_body
      %s22 = ssub.s32 %s17, 1
      %s23 = ssub.s32 %s17, 2
      %s30 = sadd.s32 1, %s25
      %p31 = scmp.ge.s32.totalorder %s30, 1
      %s32 = scalar_select %p31, 0, %s30
      %s33 = sadd.s32 1, %s24
      %s34 = scalar_select %p31, %s33, %s24
      %p35 = scmp.ge.s32.totalorder %s34, 2
      %s36 = scalar_select %p35, 0, %s34
      %s37 = ssub.s32 %s24, %s36
      %s38 = ssub.s32 %s25, %s32
      %s39 = sor.u32 %s37, %s38
      %p40 = scmp.eq.s32.totalorder %s39, 0
      %s42 = sadd.s32 %s41, 1
      %s43 = scalar_select %p40, %s41, %s42
      %p46 = pneg %p40
      %p47 = scmp.eq.s32.totalorder %s17, 1
      %p48 = por %p46, %p47
      %p49 = scmp.ne.s32.totalorder %s41, %s44
      %p50 = scmp.eq.s32.totalorder %s17, 0
      %p51 = por %p49, %p50
      %p52 = scmp.ne.s32.totalorder %s41, %s44
      %p53 = scmp.eq.s32.totalorder %s22, 1
      %p54 = por %p52, %p53
      %p55 = scmp.ne.s32.totalorder %s44, %s45
      %p56 = scmp.eq.s32.totalorder %s22, 0
      %p57 = por %p55, %p56
      %p58 = scmp.ne.s32.totalorder %s44, %s45
      %p59 = scmp.eq.s32.totalorder %s23, 1
      %p60 = por %p58, %p59
      %p62 = scmp.ne.s32.totalorder %s45, %s61
      %p63 = scmp.eq.s32.totalorder %s23, 0
      %p64 = por %p62, %p63
      %s66 = sadd.s32 %s65, 1
      %p69 = scmp.eq.s32.totalorder %s17, 1
      %p70 = scmp.ne.s32.totalorder %s65, %s67
      %p71 = scmp.eq.s32.totalorder %s17, 0
      %p72 = por %p70, %p71
      %p73 = scmp.ne.s32.totalorder %s65, %s67
      %p74 = scmp.eq.s32.totalorder %s22, 1
      %p75 = por %p73, %p74
      %p76 = scmp.ne.s32.totalorder %s67, %s68
      %p77 = scmp.eq.s32.totalorder %s22, 0
      %p78 = por %p76, %p77
      %p79 = scmp.ne.s32.totalorder %s67, %s68
      %p80 = scmp.eq.s32.totalorder %s23, 1
      %p81 = por %p79, %p80
      %p83 = scmp.ne.s32.totalorder %s68, %s82
      %p84 = scmp.eq.s32.totalorder %s23, 0
      %p85 = por %p83, %p84
      %s87 = sadd.s32 %s86, 1
      %p90 = scmp.eq.s32.totalorder %s17, 1
      %p91 = scmp.ne.s32.totalorder %s86, %s88
      %p92 = scmp.eq.s32.totalorder %s17, 0
      %p93 = por %p91, %p92
      %p94 = scmp.ne.s32.totalorder %s86, %s88
      %p95 = scmp.eq.s32.totalorder %s22, 1
      %p96 = por %p94, %p95
      %p97 = scmp.ne.s32.totalorder %s88, %s89
      %p98 = scmp.eq.s32.totalorder %s22, 0
      %p99 = por %p97, %p98
      %p100 = scmp.ne.s32.totalorder %s88, %s89
      %p101 = scmp.eq.s32.totalorder %s23, 1
      %p102 = por %p100, %p101
      %p104 = scmp.ne.s32.totalorder %s89, %s103
      %p105 = scmp.eq.s32.totalorder %s23, 0
      %p106 = por %p104, %p105
      %s108 = sadd.s32 %s107, 1
      %p111 = scmp.eq.s32.totalorder %s17, 1
      %p112 = scmp.ne.s32.totalorder %s107, %s109
      %p113 = scmp.eq.s32.totalorder %s17, 0
      %p114 = por %p112, %p113
      %p115 = scmp.ne.s32.totalorder %s107, %s109
      %p116 = scmp.eq.s32.totalorder %s22, 1
      %p117 = por %p115, %p116
      %p118 = scmp.ne.s32.totalorder %s109, %s110
      %p119 = scmp.eq.s32.totalorder %s22, 0
      %p120 = por %p118, %p119
      %p121 = scmp.ne.s32.totalorder %s109, %s110
      %p122 = scmp.eq.s32.totalorder %s23, 1
      %p123 = por %p121, %p122
      %p125 = scmp.ne.s32.totalorder %s110, %s124
      %p126 = scmp.eq.s32.totalorder %s23, 0
      %p127 = por %p125, %p126
      %s129 = sadd.s32 %s128, 1
      %p132 = scmp.eq.s32.totalorder %s17, 1
      %p133 = scmp.ne.s32.totalorder %s128, %s130
      %p134 = scmp.eq.s32.totalorder %s17, 0
      %p135 = por %p133, %p134
      %p136 = scmp.ne.s32.totalorder %s128, %s130
      %p137 = scmp.eq.s32.totalorder %s22, 1
      %p138 = por %p136, %p137
      %p139 = scmp.ne.s32.totalorder %s130, %s131
      %p140 = scmp.eq.s32.totalorder %s22, 0
      %p141 = por %p139, %p140
      %p142 = scmp.ne.s32.totalorder %s130, %s131
      %p143 = scmp.eq.s32.totalorder %s23, 1
      %p144 = por %p142, %p143
      %p146 = scmp.ne.s32.totalorder %s131, %s145
      %p147 = scmp.eq.s32.totalorder %s23, 0
      %p148 = por %p146, %p147
      %s150 = sadd.s32 %s149, 1
      %p153 = scmp.eq.s32.totalorder %s17, 1
      %p154 = scmp.ne.s32.totalorder %s149, %s151
      %p155 = scmp.eq.s32.totalorder %s17, 0
      %p156 = por %p154, %p155
      %p157 = scmp.ne.s32.totalorder %s149, %s151
      %p158 = scmp.eq.s32.totalorder %s22, 1
      %p159 = por %p157, %p158
      %p160 = scmp.ne.s32.totalorder %s151, %s152
      %p161 = scmp.eq.s32.totalorder %s22, 0
      %p162 = por %p160, %p161
      %p163 = scmp.ne.s32.totalorder %s151, %s152
      %p164 = scmp.eq.s32.totalorder %s23, 1
      %p165 = por %p163, %p164
      %p167 = scmp.ne.s32.totalorder %s152, %s166
      %p168 = scmp.eq.s32.totalorder %s23, 0
      %p169 = por %p167, %p168
      %s171 = sadd.s32 %s170, 1
      %p174 = scmp.eq.s32.totalorder %s17, 1
      %p175 = scmp.ne.s32.totalorder %s170, %s172
      %p176 = scmp.eq.s32.totalorder %s17, 0
      %p177 = por %p175, %p176
      %p178 = scmp.ne.s32.totalorder %s170, %s172
      %p179 = scmp.eq.s32.totalorder %s22, 1
      %p180 = por %p178, %p179
      %p181 = scmp.ne.s32.totalorder %s172, %s173
      %p182 = scmp.eq.s32.totalorder %s22, 0
      %p183 = por %p181, %p182
      %p184 = scmp.ne.s32.totalorder %s172, %s173
      %p185 = scmp.eq.s32.totalorder %s23, 1
      %p186 = por %p184, %p185
      %p188 = scmp.ne.s32.totalorder %s173, %s187
      %p189 = scmp.eq.s32.totalorder %s23, 0
      %p190 = por %p188, %p189
      %s191 = ssub.s32 %s24, %s36
      %s192 = ssub.s32 %s25, %s32
      %s193 = sor.u32 %s191, %s192
      %p194 = scmp.eq.s32.totalorder %s193, 0
      %s196 = sadd.s32 %s195, 1
      %s197 = scalar_select %p194, %s195, %s196
      %p200 = pneg %p194
      %p201 = scmp.eq.s32.totalorder %s17, 1
      %p202 = por %p200, %p201
      %p203 = scmp.ne.s32.totalorder %s195, %s198
      %p204 = scmp.eq.s32.totalorder %s17, 0
      %p205 = por %p203, %p204
      %p206 = scmp.ne.s32.totalorder %s195, %s198
      %p207 = scmp.eq.s32.totalorder %s22, 1
      %p208 = por %p206, %p207
      %p209 = scmp.ne.s32.totalorder %s198, %s199
      %p210 = scmp.eq.s32.totalorder %s22, 0
      %p211 = por %p209, %p210
      %p212 = scmp.ne.s32.totalorder %s198, %s199
      %p213 = scmp.eq.s32.totalorder %s23, 1
      %p214 = por %p212, %p213
      %p216 = scmp.ne.s32.totalorder %s199, %s215
      %p217 = scmp.eq.s32.totalorder %s23, 0
      %p218 = por %p216, %p217
      %p219 = scmp.le.s32.totalorder 1, %s17
      %p220 = scmp.lt.s32.totalorder %s17, 3
      %p221 = pnand %p219, %p220
      %p222 = pneg %p221
      // Predicated region
      $region9: #{tpu_custom_call.1} parent=5 // pred_check
        _
      $region10: #{tpu_custom_call.1} parent=5 // pred_check_branch
        %224 = sbr.rel (%p221) target = $region12
      $region11: #{tpu_custom_call.1} parent=5 // pred_region
        %s225 = ssub.s32 %s17, 1
        // Predicated region
        $region13: #{tpu_custom_call.1} parent=11 // pred_check
          %p226 = pneg %p78
        $region14: #{tpu_custom_call.1} parent=11 // pred_check_branch
          %228 = sbr.rel (%p226) target = $region16
        $region15: #{tpu_custom_call.1} parent=11 // pred_region
          _
        $region16: #{tpu_custom_call.1} parent=11 // pred_fallthru
          _
        // Predicated region
        $region17: #{tpu_custom_call.1} parent=11 // pred_check
          %p229 = pneg %p99
        $region18: #{tpu_custom_call.1} parent=11 // pred_check_branch
          %231 = sbr.rel (%p229) target = $region20
        $region19: #{tpu_custom_call.1} parent=11 // pred_region
          _
        $region20: #{tpu_custom_call.1} parent=11 // pred_fallthru
          _
        // Predicated region
        $region21: #{tpu_custom_call.1} parent=11 // pred_check
          %p232 = pneg %p120
        $region22: #{tpu_custom_call.1} parent=11 // pred_check_branch
          %234 = sbr.rel (%p232) target = $region24
        $region23: #{tpu_custom_call.1} parent=11 // pred_region
          _
        $region24: #{tpu_custom_call.1} parent=11 // pred_fallthru
          _
        // Predicated region
        $region25: #{tpu_custom_call.1} parent=11 // pred_check
          %p235 = pneg %p141
        $region26: #{tpu_custom_call.1} parent=11 // pred_check_branch
          %237 = sbr.rel (%p235) target = $region28
        $region27: #{tpu_custom_call.1} parent=11 // pred_region
          _
        $region28: #{tpu_custom_call.1} parent=11 // pred_fallthru
          _
        // Predicated region
        $region29: #{tpu_custom_call.1} parent=11 // pred_check
          %p238 = pneg %p162
        $region30: #{tpu_custom_call.1} parent=11 // pred_check_branch
          %240 = sbr.rel (%p238) target = $region32
        $region31: #{tpu_custom_call.1} parent=11 // pred_region
          _
        $region32: #{tpu_custom_call.1} parent=11 // pred_fallthru
          _
        // Predicated region
        $region33: #{tpu_custom_call.1} parent=11 // pred_check
          %p241 = pneg %p183
        $region34: #{tpu_custom_call.1} parent=11 // pred_check_branch
          %243 = sbr.rel (%p241) target = $region36
        $region35: #{tpu_custom_call.1} parent=11 // pred_region
          _
        $region36: #{tpu_custom_call.1} parent=11 // pred_fallthru
          _
      $region12: #{tpu_custom_call.1} parent=5 // pred_fallthru
        _
      %p244 = scmp.lt.s32.totalorder %s17, 2
      // Predicated region
      $region37: #{tpu_custom_call.1} parent=5 // pred_check
        %p245 = pneg %p244
      $region38: #{tpu_custom_call.1} parent=5 // pred_check_branch
        %247 = sbr.rel (%p245) target = $region40
      $region39: #{tpu_custom_call.1} parent=5 // pred_region
        // Predicated region
        $region41: #{tpu_custom_call.1} parent=39 // pred_check
          %p248 = pneg %p51
        $region42: #{tpu_custom_call.1} parent=39 // pred_check_branch
          %250 = sbr.rel (%p248) target = $region44
        $region43: #{tpu_custom_call.1} parent=39 // pred_region
          %s251 = smul.u32 2, %s25
          %p252 = scmp.lt.s32.totalorder %s24, 1
          %s253 = scalar_select %p252, %s24, 1
          %p254 = scmp.lt.s32.totalorder %s251, 1
          %s255 = scalar_select %p254, %s251, 1
          %s256 = smul.addr %s253, 2
          %s257 = sadd.s32 %s255, %s256
          %s258 = smul.addr %s257, 8
          %s259 = scalar_lea.vmem %s0, %s258
          %s260 = smul.u32 2, %s25
        $region44: #{tpu_custom_call.1} parent=39 // pred_fallthru
          _
      $region40: #{tpu_custom_call.1} parent=5 // pred_fallthru
        _
      %p261 = scmp.le.s32.totalorder 1, %s17
      %p262 = scmp.lt.s32.totalorder %s17, 3
      %p263 = pnand %p261, %p262
      %p264 = pneg %p263
      // Predicated region
      $region45: #{tpu_custom_call.1} parent=5 // pred_check
        _
      $region46: #{tpu_custom_call.1} parent=5 // pred_check_branch
        %266 = sbr.rel (%p263) target = $region48
      $region47: #{tpu_custom_call.1} parent=5 // pred_region
        %s267 = ssub.s32 %s17, 1
        %s268 = smul.u32 2, %s27
        %p269 = scmp.lt.s32.totalorder %s26, 1
        %s270 = scalar_select %p269, %s26, 1
        %p271 = scmp.lt.s32.totalorder %s268, 1
        %s272 = scalar_select %p271, %s268, 1
        %s273 = smul.addr %s270, 2
        %s274 = sadd.s32 %s272, %s273
        %s275 = smul.addr %s274, 8
        %s276 = scalar_lea.vmem %s0, %s275
        %p277 = pneg %p57
        %p278 = pneg %p54
        %p279 = pneg %p78
        %p280 = pneg %p75
        %p281 = pneg %p99
        %p282 = pneg %p96
        %p283 = pneg %p120
        %p284 = pneg %p117
        %p285 = pneg %p141
        %p286 = pneg %p138
        %p287 = pneg %p162
        %p288 = pneg %p159
        %p289 = pneg %p183
        %p290 = pneg %p180
        %p291 = pneg %p211
        %p292 = pneg %p208
        %s293 = sand.u32 %s198, 1
        %s294 = scalar_lea.sflag [#allocation4], %s293
        %s295 = sand.u32 %s198, 1
        %s296 = smul.addr %s295, 2
        %s297 = scalar_lea.vmem [#allocation3], %s296
        %s298 = smul.u32 2, %s27
        %p299 = scmp.lt.s32.totalorder %s26, 1
        %s300 = scalar_select %p299, %s26, 1
        %p301 = scmp.lt.s32.totalorder %s298, 1
        %s302 = scalar_select %p301, %s298, 1
        %s303 = smul.addr %s300, 2
        %s304 = sadd.s32 %s302, %s303
        %s305 = smul.addr %s304, 8
        %s306 = scalar_lea.vmem %s0, %s305
        %s307 = smul.u32 2, %s27
        %s308 = smul.u32 2, %s27
        %v310 = vld [vmem:[%s306] sm:$0xff]
        %v311 = vld [vmem:[%s306 + $0x8] sm:$0xff]
        %v312 = vpack.c.bf16 %v310, %v310
        %v313 = vpack.c.bf16 %v311, %v311
        %v314 = vld [vmem:[%s1] sm:$0xf]
        %v315 = vld [vmem:[%s1 + $0x4] sm:$0xf]
        %v316 = vld [vmem:[%s1 + $0x8] sm:$0xf]
        %v317 = vld [vmem:[%s1 + $0xc] sm:$0xf]
        %v318 = vld [vmem:[%s2] sm:$0xff]
        %v319 = vld [vmem:[%s2 + $0x8] sm:$0xff]
        %v320 = vld [vmem:[%s2 + $0x10] sm:$0xff]
        %v321 = vld [vmem:[%s2 + $0x18] sm:$0xff]
        %323 = vset.pattern.permute.xlu0 0
        %324 = vperm.xlu0 %323, %v318
        %v325 = vpop.permute.xlu0 %324
        %328 = vset.pattern.permute.xlu0 0
        %329 = vperm.xlu0 %328, %v319
        %v330 = vpop.permute.xlu0 %329
        %333 = vset.pattern.permute.xlu0 0
        %334 = vperm.xlu0 %333, %v320
        %v335 = vpop.permute.xlu0 %334
        %338 = vset.pattern.permute.xlu0 0
        %339 = vperm.xlu0 %338, %v321
        %v340 = vpop.permute.xlu0 %339
        %v346 = vunpack.c.l.b16 %v314
        %v347 = vunpack.c.l.b16 %v315
        %v348 = vunpack.c.l.b16 %v316
        %v349 = vunpack.c.l.b16 %v317
        %v350 = vpack.c.b16 %v347, %v346
        %v351 = vpack.c.b16 %v349, %v348
        %vm352 = vcmask 64512
        %v354 = vsel %vm352, %v350, 0
        %v357 = vsel %vm352, %v351, 0
        %vm359 = vcmask 1043456
        %v361 = vsel %vm359, %v312, 0
        %v364 = vsel %vm359, %v313, 0
        %366 = vmatpush.bf16.msra.mxu0 0
        %367 = vmatpush.bf16.msra.mxu0 0
        %368 = vmatpush.bf16.msra.mxu0 0
        %369 = vmatpush.bf16.msra.mxu0 0
        %370 = vmatpush.bf16.msra.mxu0 0
        %371 = vmatpush.bf16.msra.mxu0 0
        %372 = vmatpush.bf16.msra.mxu0 0
        %373 = vmatpush.bf16.msra.mxu0 %v361
        %374 = vmatmul.bf16.gmra.mxu0 %v354
        %v375 = vpop.f32.mrf.mxu0
        %v376 = vadd.f32 %v325, %v375
        %v377 = vpop.f32.mrf.mxu0
        %v378 = vadd.f32 %v330, %v377
        %379 = vmatmul.bf16.gmra.mxu0 %v357
        %v380 = vpop.f32.mrf.mxu0
        %v381 = vadd.f32 %v335, %v380
        %v382 = vpop.f32.mrf.mxu0
        %v383 = vadd.f32 %v340, %v382
        %384 = vdwg.mxu0
        %385 = vmatpush.bf16.msra.mxu0 0
        %386 = vmatpush.bf16.msra.mxu0 0
        %387 = vmatpush.bf16.msra.mxu0 0
        %388 = vmatpush.bf16.msra.mxu0 0
        %389 = vmatpush.bf16.msra.mxu0 0
        %390 = vmatpush.bf16.msra.mxu0 0
        %391 = vmatpush.bf16.msra.mxu0 0
        %392 = vmatpush.bf16.msra.mxu0 %v364
        %393 = vmatmul.bf16.gmra.mxu0 %v354
        %v394 = vpop.f32.mrf.mxu0
        %v395 = vadd.f32 %v325, %v394
        %v396 = vpop.f32.mrf.mxu0
        %v397 = vadd.f32 %v330, %v396
        %398 = vmatmul.bf16.gmra.mxu0 %v357
        %v399 = vpop.f32.mrf.mxu0
        %v400 = vadd.f32 %v335, %v399
        %v401 = vpop.f32.mrf.mxu0
        %v402 = vadd.f32 %v340, %v401
        %403 = vdwg.mxu0
        %v404 = vmax.f32 %v376, 0.0
        %v405 = vmax.f32 %v395, 0.0
        %v406 = vmax.f32 %v378, 0.0
        %v407 = vmax.f32 %v397, 0.0
        %v408 = vmax.f32 %v381, 0.0
        %v409 = vmax.f32 %v400, 0.0
        %v410 = vmax.f32 %v383, 0.0
        %v411 = vmax.f32 %v402, 0.0
        %v412 = vld [vmem:[%s3] sm:$0xf]
        %v413 = vld [vmem:[%s3 + $0x4] sm:$0xf]
        %v414 = vld [vmem:[%s3 + $0x8] sm:$0xf]
        %v415 = vld [vmem:[%s3 + $0xc] sm:$0xf]
        %v416 = vpack.c.bf16 %v406, %v404
        %v417 = vpack.c.bf16 %v407, %v405
        %v418 = vpack.c.bf16 %v410, %v408
        %v419 = vpack.c.bf16 %v411, %v409
        %v420 = vld [vmem:[%s4] sm:$0xff]
        %v421 = vld [vmem:[%s4 + $0x8] sm:$0xff]
        %v422 = vld [vmem:[%s4 + $0x10] sm:$0xff]
        %v423 = vld [vmem:[%s4 + $0x18] sm:$0xff]
        %425 = vset.pattern.permute.xlu0 0
        %426 = vperm.xlu0 %425, %v420
        %v427 = vpop.permute.xlu0 %426
        %430 = vset.pattern.permute.xlu0 0
        %431 = vperm.xlu0 %430, %v421
        %v432 = vpop.permute.xlu0 %431
        %435 = vset.pattern.permute.xlu0 0
        %436 = vperm.xlu0 %435, %v422
        %v437 = vpop.permute.xlu0 %436
        %440 = vset.pattern.permute.xlu0 0
        %441 = vperm.xlu0 %440, %v423
        %v442 = vpop.permute.xlu0 %441
        %v448 = vunpack.c.l.b16 %v412
        %v449 = vunpack.c.l.b16 %v413
        %v450 = vunpack.c.l.b16 %v414
        %v451 = vunpack.c.l.b16 %v415
        %v452 = vpack.c.b16 %v449, %v448
        %v453 = vpack.c.b16 %v451, %v450
        %vm454 = vcmask 261120
        %v456 = vsel %vm454, %v452, 0
        %v459 = vsel %vm454, %v453, 0
        %461 = vmatpush.bf16.msra.mxu0 0
        %462 = vmatpush.bf16.msra.mxu0 0
        %463 = vmatpush.bf16.msra.mxu0 0
        %464 = vmatpush.bf16.msra.mxu0 0
        %465 = vmatpush.bf16.msra.mxu0 0
        %466 = vmatpush.bf16.msra.mxu0 0
        %467 = vmatpush.bf16.msra.mxu0 %v418
        %468 = vmatpush.bf16.msra.mxu0 %v416
        %469 = vmatmul.bf16.gmra.mxu0 %v456
        %v470 = vpop.f32.mrf.mxu0
        %v471 = vadd.f32 %v427, %v470
        %v472 = vpop.f32.mrf.mxu0
        %v473 = vadd.f32 %v432, %v472
        %474 = vmatmul.bf16.gmra.mxu0 %v459
        %v475 = vpop.f32.mrf.mxu0
        %v476 = vadd.f32 %v437, %v475
        %v477 = vpop.f32.mrf.mxu0
        %v478 = vadd.f32 %v442, %v477
        %479 = vdwg.mxu0
        %480 = vmatpush.bf16.msra.mxu0 0
        %481 = vmatpush.bf16.msra.mxu0 0
        %482 = vmatpush.bf16.msra.mxu0 0
        %483 = vmatpush.bf16.msra.mxu0 0
        %484 = vmatpush.bf16.msra.mxu0 0
        %485 = vmatpush.bf16.msra.mxu0 0
        %486 = vmatpush.bf16.msra.mxu0 %v419
        %487 = vmatpush.bf16.msra.mxu0 %v417
        %488 = vmatmul.bf16.gmra.mxu0 %v456
        %v489 = vpop.f32.mrf.mxu0
        %v490 = vadd.f32 %v427, %v489
        %v491 = vpop.f32.mrf.mxu0
        %v492 = vadd.f32 %v432, %v491
        %493 = vmatmul.bf16.gmra.mxu0 %v459
        %v494 = vpop.f32.mrf.mxu0
        %v495 = vadd.f32 %v437, %v494
        %v496 = vpop.f32.mrf.mxu0
        %v497 = vadd.f32 %v442, %v496
        %498 = vdwg.mxu0
        %v499 = vmax.f32 %v471, 0.0
        %v500 = vmax.f32 %v490, 0.0
        %v501 = vmax.f32 %v473, 0.0
        %v502 = vmax.f32 %v492, 0.0
        %v503 = vmax.f32 %v476, 0.0
        %v504 = vmax.f32 %v495, 0.0
        %v505 = vmax.f32 %v478, 0.0
        %v506 = vmax.f32 %v497, 0.0
        %v507 = vld [vmem:[%s5] sm:$0x1]
        %v508 = vpack.c.bf16 %v501, %v499
        %v509 = vpack.c.bf16 %v502, %v500
        %v510 = vpack.c.bf16 %v505, %v503
        %v511 = vpack.c.bf16 %v506, %v504
        %s512 = sld [smem:[#allocation2]]
        %v513 = vstv %s512
        %v515 = vsel %vm454, %v507, 0
        %517 = vmatpush.bf16.msra.mxu0 0
        %518 = vmatpush.bf16.msra.mxu0 0
        %519 = vmatpush.bf16.msra.mxu0 0
        %520 = vmatpush.bf16.msra.mxu0 0
        %521 = vmatpush.bf16.msra.mxu0 0
        %522 = vmatpush.bf16.msra.mxu0 0
        %523 = vmatpush.bf16.msra.mxu0 %v510
        %524 = vmatpush.bf16.msra.mxu0 %v508
        %525 = vmatmul.bf16.gmra.mxu0 %v515
        %v526 = vpop.f32.mrf.mxu0
        %v527 = vadd.f32 %v513, %v526
        %v528 = vpop.f32.mrf.mxu0
        %529 = vdwg.mxu0
        %530 = vmatpush.bf16.msra.mxu0 0
        %531 = vmatpush.bf16.msra.mxu0 0
        %532 = vmatpush.bf16.msra.mxu0 0
        %533 = vmatpush.bf16.msra.mxu0 0
        %534 = vmatpush.bf16.msra.mxu0 0
        %535 = vmatpush.bf16.msra.mxu0 0
        %536 = vmatpush.bf16.msra.mxu0 %v511
        %537 = vmatpush.bf16.msra.mxu0 %v509
        %538 = vmatmul.bf16.gmra.mxu0 %v515
        %v539 = vpop.f32.mrf.mxu0
        %v540 = vadd.f32 %v513, %v539
        %v541 = vpop.f32.mrf.mxu0
        %542 = vdwg.mxu0
        %v545 = vrot.slane %v540, 7
        %vm546 = vcmask 1040384
        %v547 = vsel %vm546, %v527, %v545
        %v549 = vlaneseq
        %vm550 = vcmp.ge.s32.totalorder %v549, 0
        %vm551 = vcmp.lt.s32.totalorder %v549, 256
        %vm552 = vmand %vm550, %vm551
        %553 = vst.msk [vmem:[%s297] sm:$0x3] %vm552, %v547
        %s554 = sand.u32 %s198, 1
        %s555 = scalar_lea.sflag [#allocation4], %s554
        %s556 = sand.u32 %s198, 1
        %s557 = smul.addr %s556, 2
        %s558 = scalar_lea.vmem [#allocation3], %s557
        // Predicated region
        $region49: #{tpu_custom_call.1} parent=47 // pred_check
          %p559 = pneg %p208
        $region50: #{tpu_custom_call.1} parent=47 // pred_check_branch
          %561 = sbr.rel (%p559) target = $region52
        $region51: #{tpu_custom_call.1} parent=47 // pred_region
          %s562 = smul.u32 2, %s27
          %564 = vsyncadd %s555, 0
          %s565 = smul.addr %s26, 2
          %s566 = sadd.s32 %s562, %s565
          %s567 = scalar_lea.hbm %s7, %s566
          %s569 = sshll.u32 %s558, 4
          %s570 = int_to_ptr.vmem [resolvable:$true] %s569
          %s571 = sshll.u32 %s567, 4
          %s572 = int_to_ptr.hbm [resolvable:$true] %s571
          %574 = dma.vmem_to_hbm [thread:$0]  %s570, 32, %s572, %s555
        $region52: #{tpu_custom_call.1} parent=47 // pred_fallthru
          _
      $region48: #{tpu_custom_call.1} parent=5 // pred_fallthru
        _
      %p575 = scmp.le.s32.totalorder 2, %s17
      // Predicated region
      $region53: #{tpu_custom_call.1} parent=5 // pred_check
        %p576 = pneg %p575
      $region54: #{tpu_custom_call.1} parent=5 // pred_check_branch
        %578 = sbr.rel (%p576) target = $region56
      $region55: #{tpu_custom_call.1} parent=5 // pred_region
        %s579 = ssub.s32 %s17, 2
        // Predicated region
        $region57: #{tpu_custom_call.1} parent=55 // pred_check
          %p580 = pneg %p214
        $region58: #{tpu_custom_call.1} parent=55 // pred_check_branch
          %582 = sbr.rel (%p580) target = $region60
        $region59: #{tpu_custom_call.1} parent=55 // pred_region
          %s583 = sand.u32 %s199, 1
          %s584 = scalar_lea.sflag [#allocation4], %s583
          %s585 = sand.u32 %s199, 1
          %s586 = smul.addr %s585, 2
          %s587 = scalar_lea.vmem [#allocation3], %s586
          %589 = dma.done %s584, 32
        $region60: #{tpu_custom_call.1} parent=55 // pred_fallthru
          _
      $region56: #{tpu_custom_call.1} parent=5 // pred_fallthru
        _
    $region6: #{tpu_custom_call.1} parent=1 // loop_footer
      %s21 = sadd.s32 1, %s17
    $region7: #{tpu_custom_call.1} parent=1 // loop_footer_branch
      %16 = sbr.rel target = $region3
    $region8: #{tpu_custom_call.1} parent=1 // loop_exit
      _
    %590 = vsyncpa [#allocation4], 1
    %s591 = scalar_lea.sflag [#allocation4], 1
    %592 = vsyncpa %s591, 1

</llo_original>
